<compile_context>
chip_gen: v5e
topology: v5e:2x2
jax: 0.10.0
libtpu: 0.0.40
codegen_flags: <defaults>
</compile_context>

<pallas_src>
import jax
import jax.numpy as jnp
from jax.experimental import pallas as pl
from jax.experimental.pallas import tpu as pltpu


def attention_kernel(x_ref, w_ref, b_ref, out_ref, wts_ref):
    """One batch tile of the attention forward.

    x_ref:   (TB, T, H) VMEM  -- lstm_output tile (H on lanes, T on sublanes)
    w_ref:   (1, 1, H)  VMEM  -- Linear(H, 1) weight row, lane-dense
    b_ref:   (1,)       SMEM  -- Linear bias scalar
    out_ref: (TB, H)    VMEM  -- attn_output tile
    wts_ref: (TB, T)    VMEM  -- attn_weights tile
    """
    # scores = x @ w^T + b, computed as VPU mul + lane (XLU) reduction so the
    # sequence axis T stays on sublanes (avoids the 1-wide MXU matmul and the
    # subsequent lane<->sublane relayout of the weights).
    scores = jnp.sum(
        x_ref[...].astype(jnp.float32) * w_ref[...].astype(jnp.float32),
        axis=-1,
        keepdims=True,
    ) + b_ref[0]                                             # (TB, T, 1) f32

    # softmax over the sequence axis (dim=1), all in f32.
    m = jnp.max(scores, axis=1, keepdims=True)               # (TB, 1, 1)
    p = jnp.exp(scores - m)                                  # (TB, T, 1)
    denom = jnp.sum(p, axis=1, keepdims=True)                # (TB, 1, 1)
    # approx=False keeps bit-level parity with the f32 reference; switch to
    # approx=True (EUP slot) if ~1e-3 relative tolerance is acceptable.
    weights = p * pl.reciprocal(denom, approx=False)         # (TB, T, 1)

    # attn_output = sum_t x[:, t, :] * weights[:, t]: (TB, T, 1) broadcasts
    # across H as a free lane-broadcast; re-read x_ref (VMEM loads are cheap).
    out = jnp.sum(x_ref[...].astype(jnp.float32) * weights, axis=1)  # (TB, H)

    out_ref[...] = out.astype(out_ref.dtype)
    wts_ref[...] = weights[..., 0].astype(wts_ref.dtype)


def _choose_batch_tile(B, T, H, itemsize, vmem_budget_bytes):
    """Largest batch tile (multiple of 8 when B > 8) fitting the VMEM budget."""
    if B <= 8:
        return B

    def tile_bytes(tb):
        x_blk = tb * T * H * itemsize          # input block
        out_blk = tb * (H + T) * itemsize      # both output blocks
        return 2 * (x_blk + out_blk)           # double-buffered pipeline

    tb = 8
    while tb * 2 <= B and tile_bytes(tb * 2) <= vmem_budget_bytes:
        tb *= 2
    return tb


def attention_forward(lstm_output, weight, bias):
    """lstm_output: (B, T, H); weight: (1, H) (torch Linear layout); bias: (1,)."""
    B, T, H = lstm_output.shape
    dtype = lstm_output.dtype
    itemsize = jnp.dtype(dtype).itemsize

    # Lane-dense weight row (1, 1, H) so it broadcasts directly against (TB, T, H).
    w_row = weight.reshape(1, 1, H).astype(jnp.float32)
    b = bias.reshape(1).astype(jnp.float32)

    # Budget sized for the smallest-VMEM generation (v7x: 64 MiB physical,
    # 32 MiB default scoped).  Double-buffered blocks stay <= ~24 MiB.
    vmem_limit_bytes = 32 * 1024 * 1024
    tb = _choose_batch_tile(B, T, H, itemsize, vmem_budget_bytes=24 * 1024 * 1024)
    grid = (pl.cdiv(B, tb),)

    # NOTE: for very long sequences (T*H per row too large for a VMEM block),
    # add a trailing "arbitrary" T grid axis with online-softmax accumulation;
    # not needed at these shapes.

    out_shapes = (
        jax.ShapeDtypeStruct((B, H), dtype),  # attn_output
        jax.ShapeDtypeStruct((B, T), dtype),  # attn_weights
    )

    attn_output, attn_weights = pl.pallas_call(
        attention_kernel,
        out_shape=out_shapes,
        grid_spec=pltpu.PrefetchScalarGridSpec(
            num_scalar_prefetch=0,
            grid=grid,
            in_specs=[
                pl.BlockSpec((tb, T, H), lambda i: (i, 0, 0)),         # lstm_output tile
                pl.BlockSpec((1, 1, H), lambda i: (0, 0, 0)),          # weight row
                pl.BlockSpec(memory_space=pltpu.MemorySpace.SMEM),     # bias scalar
            ],
            out_specs=[
                pl.BlockSpec((tb, H), lambda i: (i, 0)),
                pl.BlockSpec((tb, T), lambda i: (i, 0)),
            ],
        ),
        compiler_params=pltpu.CompilerParams(
            dimension_semantics=("parallel",),      # megacore split over batch (v7x)
            vmem_limit_bytes=vmem_limit_bytes,
        ),
    )(lstm_output, w_row, b)

    return attn_output, attn_weights


def attention_reference(lstm_output, weight, bias):
    # Pure-JAX reference mirroring the PyTorch forward exactly.
    scores = jnp.einsum("bth,oh->bto", lstm_output, weight)[..., 0] + bias[0]
    weights = jax.nn.softmax(scores, axis=1)
    out = jnp.sum(lstm_output * weights[..., None], axis=1)
    return out, weights


if __name__ == "__main__":
    B, T, H = 2, 8, 32  # batch, seq, hidden

    key = jax.random.PRNGKey(0)
    k_x, k_w, k_b = jax.random.split(key, 3)

    lstm_output = jax.random.normal(k_x, (B, T, H), dtype=jnp.float32)
    # nn.Linear(hidden_dim, 1): weight (1, H), bias (1,)
    weight = jax.random.normal(k_w, (1, H), dtype=jnp.float32) * 0.1
    bias = jax.random.normal(k_b, (1,), dtype=jnp.float32) * 0.1

    attn_output, attn_weights = attention_forward(lstm_output, weight, bias)
    attn_output = jax.block_until_ready(attn_output)
    attn_weights = jax.block_until_ready(attn_weights)

    ref_out, ref_wts = attention_reference(lstm_output, weight, bias)

    assert attn_output.shape == (B, H)
    assert attn_weights.shape == (B, T)
    assert jnp.allclose(attn_output, ref_out, atol=1e-5, rtol=1e-5)
    assert jnp.allclose(attn_weights, ref_wts, atol=1e-5, rtol=1e-5)

    print("KERNEL_OK")
</pallas_src>

<mosaic_0001>
module attributes {stable_mosaic.version = 11 : i64} {
  func.func @attention_kernel(%arg0: i32, %arg1: memref<2x8x32xf32, #tpu.memory_space<vmem>>, %arg2: memref<1x1x32xf32, #tpu.memory_space<vmem>>, %arg3: memref<1xf32, #tpu.memory_space<smem>>, %arg4: memref<2x32xf32, #tpu.memory_space<vmem>>, %arg5: memref<2x8xf32, #tpu.memory_space<vmem>>) attributes {dimension_semantics = [#tpu.dimension_semantics<parallel>], iteration_bounds = array<i64: 1>, scalar_prefetch = 0 : i64, scratch_operands = 0 : i64, tpu.core_type = #tpu.core_type<tc>, window_params = [{transform_indices = @transform_0, window_bounds = array<i64: 2, 8, 32>}, {pipeline_mode = #tpu.pipeline_mode<synchronous>, transform_indices = @transform_1, window_bounds = array<i64: 1, 1, 32>}, {transform_indices = @transform_2, window_bounds = array<i64: 1>}, {transform_indices = @transform_3, window_bounds = array<i64: 2, 32>}, {transform_indices = @transform_4, window_bounds = array<i64: 2, 8>}]} {
    %c0 = arith.constant 0 : index
    %c0_0 = arith.constant 0 : index
    %c0_1 = arith.constant 0 : index
    %0 = vector.load %arg1[%c0, %c0_0, %c0_1] : memref<2x8x32xf32, #tpu.memory_space<vmem>>, vector<2x8x32xf32>
    %c0_2 = arith.constant 0 : index
    %c0_3 = arith.constant 0 : index
    %c0_4 = arith.constant 0 : index
    %1 = vector.load %arg2[%c0_2, %c0_3, %c0_4] : memref<1x1x32xf32, #tpu.memory_space<vmem>>, vector<1x1x32xf32>
    %2 = vector.broadcast %1 : vector<1x1x32xf32> to vector<2x8x32xf32>
    %3 = arith.mulf %0, %2 : vector<2x8x32xf32>
    %cst = arith.constant dense<0.000000e+00> : vector<2x8xf32>
    %4 = vector.multi_reduction <add>, %3, %cst [2] : vector<2x8x32xf32> to vector<2x8xf32>
    %5 = vector.shape_cast %4 : vector<2x8xf32> to vector<2x8x1xf32>
    %c0_5 = arith.constant 0 : index
    %6 = memref.load %arg3[%c0_5] : memref<1xf32, #tpu.memory_space<smem>>
    %7 = vector.broadcast %6 : f32 to vector<2x8x1xf32>
    %8 = arith.addf %5, %7 : vector<2x8x1xf32>
    %cst_6 = arith.constant dense<0xFF800000> : vector<2x1xf32>
    %9 = vector.multi_reduction <maximumf>, %8, %cst_6 [1] : vector<2x8x1xf32> to vector<2x1xf32>
    %10 = vector.shape_cast %9 : vector<2x1xf32> to vector<2x1x1xf32>
    %11 = vector.broadcast %10 : vector<2x1x1xf32> to vector<2x8x1xf32>
    %12 = arith.subf %8, %11 : vector<2x8x1xf32>
    %13 = math.exp %12 : vector<2x8x1xf32>
    %cst_7 = arith.constant dense<0.000000e+00> : vector<2x1xf32>
    %14 = vector.multi_reduction <add>, %13, %cst_7 [1] : vector<2x8x1xf32> to vector<2x1xf32>
    %15 = vector.shape_cast %14 : vector<2x1xf32> to vector<2x1x1xf32>
    %16 = tpu.reciprocal %15 : vector<2x1x1xf32> -> vector<2x1x1xf32>
    %17 = vector.broadcast %16 : vector<2x1x1xf32> to vector<2x8x1xf32>
    %18 = arith.mulf %13, %17 : vector<2x8x1xf32>
    %c0_8 = arith.constant 0 : index
    %c0_9 = arith.constant 0 : index
    %c0_10 = arith.constant 0 : index
    %19 = vector.load %arg1[%c0_8, %c0_9, %c0_10] : memref<2x8x32xf32, #tpu.memory_space<vmem>>, vector<2x8x32xf32>
    %20 = vector.broadcast %18 : vector<2x8x1xf32> to vector<2x8x32xf32>
    %21 = arith.mulf %19, %20 : vector<2x8x32xf32>
    %cst_11 = arith.constant dense<0.000000e+00> : vector<2x32xf32>
    %22 = vector.multi_reduction <add>, %21, %cst_11 [1] : vector<2x8x32xf32> to vector<2x32xf32>
    %c0_12 = arith.constant 0 : index
    %c0_13 = arith.constant 0 : index
    %23 = vector.load %arg4[%c0_12, %c0_13] : memref<2x32xf32, #tpu.memory_space<vmem>>, vector<2x32xf32>
    tpu.vector_store %arg4[%c0_12, %c0_13], %22 {strides = array<i32>} : memref<2x32xf32, #tpu.memory_space<vmem>>, vector<2x32xf32>,
    %24 = vector.shape_cast %18 : vector<2x8x1xf32> to vector<2x8xf32>
    %c0_14 = arith.constant 0 : index
    %c0_15 = arith.constant 0 : index
    %25 = vector.load %arg5[%c0_14, %c0_15] : memref<2x8xf32, #tpu.memory_space<vmem>>, vector<2x8xf32>
    tpu.vector_store %arg5[%c0_14, %c0_15], %24 {strides = array<i32>} : memref<2x8xf32, #tpu.memory_space<vmem>>, vector<2x8xf32>,
    return
  }
  func.func @transform_0(%arg0: i32) -> (i32, i32, i32) {
    %c0_i32 = arith.constant 0 : i32
    %c0_i32_0 = arith.constant 0 : i32
    %c0_i32_1 = arith.constant 0 : i32
    return %arg0, %c0_i32, %c0_i32_0 : i32, i32, i32
  }
  func.func @transform_1(%arg0: i32) -> (i32, i32, i32) {
    %c0_i32 = arith.constant 0 : i32
    %c0_i32_0 = arith.constant 0 : i32
    %c0_i32_1 = arith.constant 0 : i32
    %c0_i32_2 = arith.constant 0 : i32
    return %c0_i32, %c0_i32_0, %c0_i32_1 : i32, i32, i32
  }
  func.func @transform_2(%arg0: i32) -> i32 {
    %c0_i32 = arith.constant 0 : i32
    %c0_i32_0 = arith.constant 0 : i32
    return %c0_i32 : i32
  }
  func.func @transform_3(%arg0: i32) -> (i32, i32) {
    %c0_i32 = arith.constant 0 : i32
    %c0_i32_0 = arith.constant 0 : i32
    return %arg0, %c0_i32 : i32, i32
  }
  func.func @transform_4(%arg0: i32) -> (i32, i32) {
    %c0_i32 = arith.constant 0 : i32
    %c0_i32_0 = arith.constant 0 : i32
    return %arg0, %c0_i32 : i32, i32
  }
}

</mosaic_0001>

<llo_original>
// kernel: tpu_custom_call.1
$region0: #{tpu_custom_call.1}
  #allocation0 [shape = 'u32[]', space=smem, size = 0x4, offset = 0x4, fixed_abs, tag = 'smem constant byte address 0x4 - core index']
  #allocation1 [shape = 'u32[72,128]{1,0:T(1,128)}', space=vmem, size = 0x9000, scoped, tag = 'internal scratch']
  #allocation2 [shape = 'f32[1]{0:T(128)S(6)}', space=smem, size = 0x200, scoped, tag = 'scoped memory for tpu_custom_call.1']
  %s0 = inlined_call_operand.hbm [shape: f32[2,8,32], index: 0, kind: input, shape index: {}]
  %s1 = inlined_call_operand.vmem [shape: f32[1,1,32], index: 1, kind: input, shape index: {}]
  %s2 = inlined_call_operand.<no memory space> [shape: f32[1], index: 2, kind: input, shape index: {}]
  %s3 = inlined_call_operand.hbm [shape: f32[2,32], index: 3, kind: output, shape index: {0}]
  %s4 = inlined_call_operand.hbm [shape: f32[2,8], index: 4, kind: output, shape index: {1}]
  %5 = xla_tuple %s3, %s4
  %s6 = sld [smem:[#allocation0]]
  $region34: #{tpu_custom_call.1} parent=0
    _
  %s8 = ssub.s32 1, %s6
  %s9 = scalar_select 0, %s8, %s6
  %10 = sst [smem:[#allocation2]] %s2
  $region1: #{tpu_custom_call.1} parent=0
    #allocation3 [shape = 'u8[8192]{0}', space=vmem, size = 0x2000, scoped, tag = 'input window, operand 0, single buffered']
    #allocation4 [shape = 's32[1]{0}', space=sflag, size = 0x4, scoped, tag = 'scoped memory for tpu_custom_call.1']
    #allocation5 [shape = 's32[1]{0}', space=sflag, size = 0x4, scoped, tag = 'scoped memory for tpu_custom_call.1']
    #allocation6 [shape = 'u8[1024]{0}', space=vmem, size = 0x400, scoped, tag = 'output window, operand 0, single buffered']
    #allocation7 [shape = 'u8[1024]{0}', space=vmem, size = 0x400, scoped, tag = 'output window, operand 1, single buffered']
    #allocation8 [shape = 's32[1]{0}', space=sflag, size = 0x4, scoped, tag = 'scoped memory for tpu_custom_call.1']
    %11 = vsyncpa [#allocation4], 0
    %12 = vsyncpa [#allocation5], 0
    %13 = vsyncpa [#allocation8], 0
    // Predicated region
    $region2: #{tpu_custom_call.1} parent=1 // pred_check
      _
    $region3: #{tpu_custom_call.1} parent=1 // pred_check_branch
      %15 = sbr.rel (0) target = $region5
    $region4: #{tpu_custom_call.1} parent=1 // pred_region
      %17 = vsyncadd [#allocation4], 0
      %s18 = sshll.u32 %s0, 4
      %s19 = int_to_ptr.hbm [resolvable:$true] %s18
      %s20 = sshll.u32 [#allocation3], 4
      %s21 = int_to_ptr.vmem [resolvable:$true] %s20
      %26 = dma.hbm_to_vmem [thread:$0]  %s19, 256, %s21, [#allocation4], 128, 128, 8
    $region5: #{tpu_custom_call.1} parent=1 // pred_fallthru
      _
    // Predicated region
    $region6: #{tpu_custom_call.1} parent=1 // pred_check
      _
    $region7: #{tpu_custom_call.1} parent=1 // pred_check_branch
      %28 = sbr.rel (0) target = $region9
    $region8: #{tpu_custom_call.1} parent=1 // pred_region
      _
    $region9: #{tpu_custom_call.1} parent=1 // pred_fallthru
      _
    // Predicated region
    $region10: #{tpu_custom_call.1} parent=1 // pred_check
      _
    $region11: #{tpu_custom_call.1} parent=1 // pred_check_branch
      %30 = sbr.rel (0) target = $region13
    $region12: #{tpu_custom_call.1} parent=1 // pred_region
      _
    $region13: #{tpu_custom_call.1} parent=1 // pred_fallthru
      _
    // Predicated region
    $region14: #{tpu_custom_call.1} parent=1 // pred_check
      _
    $region15: #{tpu_custom_call.1} parent=1 // pred_check_branch
      %32 = sbr.rel (0) target = $region17
    $region16: #{tpu_custom_call.1} parent=1 // pred_region
      %34 = dma.done [#allocation4], 256
    $region17: #{tpu_custom_call.1} parent=1 // pred_fallthru
      _
    %v35 = vld [vmem:[#allocation3] sm:$0xff]
    %v36 = vld [vmem:[#allocation3 + $0x8] sm:$0xff]
    %v37 = vld [vmem:[%s1] sm:$0x1]
    %v39 = vperm.slane %v37, 0
    %v41 = vmul.f32 %v35, %v39
    %v42 = vmul.f32 %v36, %v39
    %vm43 = vcmask 261120
    %v44 = vsel %vm43, %v41, 0.0
    %45 = vadd.xlane.f32.xlu0 %v44
    %v46 = vpop.xlane.xlu0 %45
    %v47 = vsel %vm43, %v42, 0.0
    %48 = vadd.xlane.f32.xlu0 %v47
    %v49 = vpop.xlane.xlu0 %48
    %s50 = sld [smem:[#allocation2]]
    %v51 = vstv %s50
    %v52 = vadd.f32 %v46, %v51
    %v53 = vadd.f32 %v49, %v51
    %v54 = vrot.slane %v52, 4
    %v55 = vmax.f32 %v52, %v54
    %v56 = vrot.slane %v55, 2
    %v57 = vmax.f32 %v55, %v56
    %v58 = vrot.slane %v57, 1
    %v59 = vmax.f32 %v57, %v58
    %v60 = vrot.slane %v53, 4
    %v61 = vmax.f32 %v53, %v60
    %v62 = vrot.slane %v61, 2
    %v63 = vmax.f32 %v61, %v62
    %v64 = vrot.slane %v63, 1
    %v65 = vmax.f32 %v63, %v64
    %v66 = vsub.f32 %v52, %v59
    %v67 = vsub.f32 %v53, %v65
    %v68 = vmul.f32 %v66, 1.442695
    %v69 = vpow.pop %v68
    %v70 = vmul.f32 %v67, 1.442695
    %v71 = vpow.pop %v70
    %v72 = vrot.slane %v69, 4
    %v73 = vadd.f32 %v69, %v72
    %v74 = vrot.slane %v73, 2
    %v75 = vadd.f32 %v73, %v74
    %v76 = vrot.slane %v75, 1
    %v77 = vadd.f32 %v75, %v76
    %v78 = vrot.slane %v71, 4
    %v79 = vadd.f32 %v71, %v78
    %v80 = vrot.slane %v79, 2
    %v81 = vadd.f32 %v79, %v80
    %v82 = vrot.slane %v81, 1
    %v83 = vadd.f32 %v81, %v82
    %v84 = vrcp.pop %v77
    %v85 = vmul.f32 %v77, %v84
    %v86 = vsub.f32 1.0, %v85
    %v87 = vmul.f32 %v84, %v86
    %v88 = vadd.f32 %v84, %v87
    %vm89 = vweird.f32 %v77
    %vm90 = vweird.f32 %v84
    %vm91 = vmor %vm89, %vm90
    %v92 = vsel %vm91, %v84, %v88
    %v93 = vand.u32 2147483647, %v77
    %vm94 = vcmp.eq.f32.partialorder %v93, 8.507059e+37
    %v95 = vand.u32 %v77, 2147483648
    %v96 = vor.u32 1.1754944e-38, %v95
    %v97 = vsel %vm94, %v96, %v92
    %v98 = vrcp.pop %v83
    %v99 = vmul.f32 %v83, %v98
    %v100 = vsub.f32 1.0, %v99
    %v101 = vmul.f32 %v98, %v100
    %v102 = vadd.f32 %v98, %v101
    %vm103 = vweird.f32 %v83
    %vm104 = vweird.f32 %v98
    %vm105 = vmor %vm103, %vm104
    %v106 = vsel %vm105, %v98, %v102
    %v107 = vand.u32 2147483647, %v83
    %vm108 = vcmp.eq.f32.partialorder %v107, 8.507059e+37
    %v109 = vand.u32 %v83, 2147483648
    %v110 = vor.u32 1.1754944e-38, %v109
    %v111 = vsel %vm108, %v110, %v106
    %v112 = vmul.f32 %v69, %v97
    %v113 = vmul.f32 %v71, %v111
    %v114 = vmul.f32 %v35, %v112
    %v115 = vmul.f32 %v36, %v113
    %v116 = vsel %vm43, %v114, 0.0
    %v117 = vrot.slane %v116, 4
    %v118 = vadd.f32 %v116, %v117
    %v119 = vrot.slane %v118, 2
    %v120 = vadd.f32 %v118, %v119
    %v121 = vrot.slane %v120, 1
    %v122 = vadd.f32 %v120, %v121
    %v123 = vsel %vm43, %v115, 0.0
    %v124 = vrot.slane %v123, 4
    %v125 = vadd.f32 %v123, %v124
    %v126 = vrot.slane %v125, 2
    %v127 = vadd.f32 %v125, %v126
    %v128 = vrot.slane %v127, 1
    %v129 = vadd.f32 %v127, %v128
    %vm132 = vcmask 1041409
    %v133 = vsel %vm132, %v129, %v122
    %vm135 = vcmask 254976
    %136 = vst.msk [vmem:[#allocation6] sm:$0x3] %vm135, %v133
    %v139 = vlaneseq
    %v140 = vand.u32 %v139, 127
    %v141 = vperm.slane %v112, %v140
    %v142 = vperm.slane %v113, %v140
    %v143 = vsel %vm132, %v142, %v141
    %vm145 = vcmask 58368
    %146 = vst.msk [vmem:[#allocation7] sm:$0x3] %vm145, %v143
    // Predicated region
    $region18: #{tpu_custom_call.1} parent=1 // pred_check
      _
    $region19: #{tpu_custom_call.1} parent=1 // pred_check_branch
      %148 = sbr.rel (0) target = $region21
    $region20: #{tpu_custom_call.1} parent=1 // pred_region
      %150 = vsyncadd [#allocation5], 0
      %s152 = sshll.u32 [#allocation6], 4
      %s153 = int_to_ptr.vmem [resolvable:$true] %s152
      %s154 = sshll.u32 %s3, 4
      %s155 = int_to_ptr.hbm [resolvable:$true] %s154
      %157 = dma.vmem_to_hbm [thread:$0]  %s153, 32, %s155, [#allocation5]
    $region21: #{tpu_custom_call.1} parent=1 // pred_fallthru
      _
    // Predicated region
    $region22: #{tpu_custom_call.1} parent=1 // pred_check
      _
    $region23: #{tpu_custom_call.1} parent=1 // pred_check_branch
      %159 = sbr.rel (0) target = $region25
    $region24: #{tpu_custom_call.1} parent=1 // pred_region
      %161 = vsyncadd [#allocation8], 0
      %s163 = sshll.u32 [#allocation7], 4
      %s164 = int_to_ptr.vmem [resolvable:$true] %s163
      %s165 = sshll.u32 %s4, 4
      %s166 = int_to_ptr.hbm [resolvable:$true] %s165
      %168 = dma.vmem_to_hbm [thread:$0]  %s164, 32, %s166, [#allocation8]
    $region25: #{tpu_custom_call.1} parent=1 // pred_fallthru
      _
    // Predicated region
    $region26: #{tpu_custom_call.1} parent=1 // pred_check
      _
    $region27: #{tpu_custom_call.1} parent=1 // pred_check_branch
      %170 = sbr.rel (0) target = $region29
    $region28: #{tpu_custom_call.1} parent=1 // pred_region
      %172 = dma.done [#allocation5], 32
    $region29: #{tpu_custom_call.1} parent=1 // pred_fallthru
      _
    // Predicated region
    $region30: #{tpu_custom_call.1} parent=1 // pred_check
      _
    $region31: #{tpu_custom_call.1} parent=1 // pred_check_branch
      %174 = sbr.rel (0) target = $region33
    $region32: #{tpu_custom_call.1} parent=1 // pred_region
      %176 = dma.done [#allocation8], 32
    $region33: #{tpu_custom_call.1} parent=1 // pred_fallthru
      _
    %177 = vsyncpa [#allocation4], 1
    %178 = vsyncpa [#allocation5], 1
    %179 = vsyncpa [#allocation8], 1

</llo_original>
